<compile_context>
chip_gen: v7x
topology: tpu7x:2x2x1
jax: 0.10.0
libtpu: 0.0.40
codegen_flags: <defaults>
</compile_context>

<pallas_src>
import functools

import jax
import jax.numpy as jnp
from jax import lax
from jax.experimental import pallas as pl
from jax.experimental.pallas import tpu as pltpu


def _mha_kernel(x_ref, wqkv_ref, bqkv_ref, wo_ref, bo_ref, o_ref, ctx_ref, *,
                num_heads, head_dim, scale):
    E = num_heads * head_dim
    x = x_ref[0]                                       # (S, E) bf16

    # Fused QKV projection: one (S,E) x (E,3E) MXU matmul, f32 accumulation.
    qkv = jnp.dot(x, wqkv_ref[...],
                  preferred_element_type=jnp.float32) + bqkv_ref[...]   # (S, 3E) f32

    # TODO(synk): switch to a head-batched einsum ('hqd,hkd->hqk') once
    # head_dim >= 128; at head_dim=8 the required lane-split reshape costs
    # more than static column slices.
    for h in range(num_heads):
        lo = h * head_dim
        hi = lo + head_dim
        q_h = qkv[:, lo:hi].astype(jnp.bfloat16)                 # (S, D)
        k_h = qkv[:, E + lo:E + hi].astype(jnp.bfloat16)         # (S, D)
        v_h = qkv[:, 2 * E + lo:2 * E + hi].astype(jnp.bfloat16)  # (S, D)

        # Q @ K^T without materializing a transpose: contract last axes.
        scores = lax.dot_general(
            q_h, k_h, (((1,), (1,)), ((), ())),
            preferred_element_type=jnp.float32) * scale          # (S, S) f32
        scores = scores - jnp.max(scores, axis=-1, keepdims=True)
        p = jnp.exp(scores)
        p = p * pl.reciprocal(jnp.sum(p, axis=-1, keepdims=True), approx=True)

        ctx_h = jnp.dot(p.astype(jnp.bfloat16), v_h,
                        preferred_element_type=jnp.float32)      # (S, D) f32
        ctx_ref[:, lo:hi] = ctx_h.astype(jnp.bfloat16)

    # Output projection from the (S, E) context slab (pre-transposed Wo).
    out = jnp.dot(ctx_ref[...], wo_ref[...],
                  preferred_element_type=jnp.float32) + bo_ref[...]       # (S, E) f32
    o_ref[0] = out.astype(o_ref.dtype)


def multi_head_attention(x_bse, params, *, num_heads):
    """x_bse: (B, S, E) float32 -> (B, S, E) float32."""
    B, S, E = x_bse.shape
    head_dim = E // num_heads
    scale = float(head_dim) ** -0.5

    wq, bq, wk, bk, wv, bv, wo, bo = params

    # One-time weight prep on the XLA side: pre-transpose + fuse QKV, bf16.
    wqkv_t = jnp.concatenate([wq.T, wk.T, wv.T], axis=1).astype(jnp.bfloat16)  # (E, 3E)
    bqkv = jnp.concatenate([bq, bk, bv]).reshape(1, 3 * E).astype(jnp.float32)
    wo_t = wo.T.astype(jnp.bfloat16)                                           # (E, E)
    bo2 = bo.reshape(1, E).astype(jnp.float32)
    x_bf16 = x_bse.astype(jnp.bfloat16)

    kernel = functools.partial(
        _mha_kernel, num_heads=num_heads, head_dim=head_dim, scale=scale)

    x_spec = pl.BlockSpec((1, S, E), lambda b: (b, 0, 0))
    wqkv_spec = pl.BlockSpec((E, 3 * E), lambda b: (0, 0))
    bqkv_spec = pl.BlockSpec((1, 3 * E), lambda b: (0, 0))
    wo_spec = pl.BlockSpec((E, E), lambda b: (0, 0))
    bo_spec = pl.BlockSpec((1, E), lambda b: (0, 0))

    flops = int(B * (2 * S * E * 3 * E + 4 * S * S * E + 2 * S * E * E))
    transcendentals = int(B * num_heads * S * S)
    bytes_accessed = int(x_bf16.size * 2 + wqkv_t.size * 2 + bqkv.size * 4
                         + wo_t.size * 2 + bo2.size * 4 + B * S * E * 4)

    # TODO(synk): for large S, add a query-tile grid axis with flash-style
    # online softmax; at S=8 the (8,128) block rule forces full-extent blocks.
    return pl.pallas_call(
        kernel,
        out_shape=jax.ShapeDtypeStruct((B, S, E), jnp.float32),
        grid_spec=pltpu.PrefetchScalarGridSpec(
            num_scalar_prefetch=0,
            grid=(B,),
            in_specs=[x_spec, wqkv_spec, bqkv_spec, wo_spec, bo_spec],
            out_specs=x_spec,
            scratch_shapes=[pltpu.VMEM((S, E), jnp.bfloat16)],
        ),
        compiler_params=pltpu.CompilerParams(
            dimension_semantics=("parallel",),
            vmem_limit_bytes=48 * 1024 * 1024),
        cost_estimate=pl.CostEstimate(
            flops=flops, transcendentals=transcendentals,
            bytes_accessed=bytes_accessed),
    )(x_bf16, wqkv_t, bqkv, wo_t, bo2)


def multi_head_attention_bcs(x_bcs, params, *, num_heads):
    """Matches PyTorch module: input (B, C=embed, S) -> output (B, embed, S)."""
    x_bse = jnp.transpose(x_bcs, (0, 2, 1))            # (B, S, E)
    out_bse = multi_head_attention(x_bse, params, num_heads=num_heads)
    return jnp.transpose(out_bse, (0, 2, 1))           # (B, E, S)


def _reference(x_bcs, params, *, num_heads):
    """Pure-JAX f32 reference mirroring the PyTorch forward exactly."""
    wq, bq, wk, bk, wv, bv, wo, bo = params
    B, E, S = x_bcs.shape
    D = E // num_heads
    xt = jnp.transpose(x_bcs, (0, 2, 1))                       # (B, S, E)

    def proj(w, b):
        y = xt @ w.T + b                                       # (B, S, E)
        return jnp.transpose(y.reshape(B, S, num_heads, D), (0, 2, 1, 3))  # (B,H,S,D)

    q, k, v = proj(wq, bq), proj(wk, bk), proj(wv, bv)
    scores = jnp.einsum("bhqd,bhkd->bhqk", q, k) * (D ** -0.5)
    w = jax.nn.softmax(scores, axis=-1)
    ctx = jnp.einsum("bhqk,bhkd->bhqd", w, v)                  # (B,H,S,D)
    ctx = jnp.transpose(ctx, (0, 2, 1, 3)).reshape(B, S, E)
    out = ctx @ wo.T + bo
    return jnp.transpose(out, (0, 2, 1))                       # (B, E, S)


if __name__ == "__main__":
    B, E, S = 2, 32, 8       # batch, embed_dim (=channels), seq_len
    num_heads = 4

    key = jax.random.PRNGKey(0)
    keys = jax.random.split(key, 9)

    def init_linear(kw, kb, fan_in):
        bound = 1.0 / (fan_in ** 0.5)
        w = jax.random.uniform(kw, (E, E), jnp.float32, -bound, bound)
        b = jax.random.uniform(kb, (E,), jnp.float32, -bound, bound)
        return w, b

    wq, bq = init_linear(keys[0], keys[1], E)
    wk, bk = init_linear(keys[2], keys[3], E)
    wv, bv = init_linear(keys[4], keys[5], E)
    wo, bo = init_linear(keys[6], keys[7], E)
    params = (wq, bq, wk, bk, wv, bv, wo, bo)

    x = jax.random.normal(keys[8], (B, E, S), jnp.float32)     # PyTorch (B, C, S)

    out = multi_head_attention_bcs(x, params, num_heads=num_heads)
    out = jax.block_until_ready(out)

    ref = _reference(x, params, num_heads=num_heads)
    assert out.shape == (B, E, S), out.shape
    # bf16 MXU inputs -> loosen tolerance vs the f32 reference.
    max_err = float(jnp.max(jnp.abs(out - ref)))
    assert jnp.allclose(out, ref, atol=5e-2, rtol=5e-2), max_err

    print("KERNEL_OK")
</pallas_src>

<mosaic_0001>
module attributes {stable_mosaic.version = 11 : i64} {
  func.func @_mha_kernel(%arg0: i32, %arg1: memref<1x8x32xbf16, #tpu.memory_space<vmem>>, %arg2: memref<32x96xbf16, #tpu.memory_space<vmem>>, %arg3: memref<1x96xf32, #tpu.memory_space<vmem>>, %arg4: memref<32x32xbf16, #tpu.memory_space<vmem>>, %arg5: memref<1x32xf32, #tpu.memory_space<vmem>>, %arg6: memref<1x8x32xf32, #tpu.memory_space<vmem>>, %arg7: memref<8x32xbf16, #tpu.memory_space<vmem>>) attributes {dimension_semantics = [#tpu.dimension_semantics<parallel>], iteration_bounds = array<i64: 2>, scalar_prefetch = 0 : i64, scratch_operands = 1 : i64, tpu.core_type = #tpu.core_type<tc>, window_params = [{transform_indices = @transform_0, window_bounds = array<i64: 1, 8, 32>}, {pipeline_mode = #tpu.pipeline_mode<synchronous>, transform_indices = @transform_1, window_bounds = array<i64: 32, 96>}, {pipeline_mode = #tpu.pipeline_mode<synchronous>, transform_indices = @transform_2, window_bounds = array<i64: 1, 96>}, {pipeline_mode = #tpu.pipeline_mode<synchronous>, transform_indices = @transform_3, window_bounds = array<i64: 32, 32>}, {pipeline_mode = #tpu.pipeline_mode<synchronous>, transform_indices = @transform_4, window_bounds = array<i64: 1, 32>}, {transform_indices = @transform_5, window_bounds = array<i64: 1, 8, 32>}]} {
    %c0 = arith.constant 0 : index
    %c0_0 = arith.constant 0 : index
    %c0_1 = arith.constant 0 : index
    %0 = vector.load %arg1[%c0, %c0_0, %c0_1] : memref<1x8x32xbf16, #tpu.memory_space<vmem>>, vector<1x8x32xbf16>
    %1 = vector.shape_cast %0 : vector<1x8x32xbf16> to vector<8x32xbf16>
    %c0_2 = arith.constant 0 : index
    %c0_3 = arith.constant 0 : index
    %2 = vector.load %arg2[%c0_2, %c0_3] : memref<32x96xbf16, #tpu.memory_space<vmem>>, vector<32x96xbf16>
    %cst = arith.constant dense<0.000000e+00> : vector<8x96xf32>
    %3 = tpu.matmul %1, %2, %cst {dimension_numbers = #tpu.dot_dimension_numbers<[1], [0], [0], [1], [0, 0, 1, 1], [], []>} : vector<8x32xbf16>, vector<32x96xbf16>, vector<8x96xf32> -> vector<8x96xf32>
    %c0_4 = arith.constant 0 : index
    %c0_5 = arith.constant 0 : index
    %4 = vector.load %arg3[%c0_4, %c0_5] : memref<1x96xf32, #tpu.memory_space<vmem>>, vector<1x96xf32>
    %5 = vector.broadcast %4 : vector<1x96xf32> to vector<8x96xf32>
    %6 = arith.addf %3, %5 : vector<8x96xf32>
    %7 = vector.extract_strided_slice %6 {offsets = [0, 0], sizes = [8, 8], strides = [1, 1]} : vector<8x96xf32> to vector<8x8xf32>
    %8 = arith.truncf %7 : vector<8x8xf32> to vector<8x8xbf16>
    %9 = vector.extract_strided_slice %6 {offsets = [0, 32], sizes = [8, 8], strides = [1, 1]} : vector<8x96xf32> to vector<8x8xf32>
    %10 = arith.truncf %9 : vector<8x8xf32> to vector<8x8xbf16>
    %11 = vector.extract_strided_slice %6 {offsets = [0, 64], sizes = [8, 8], strides = [1, 1]} : vector<8x96xf32> to vector<8x8xf32>
    %12 = arith.truncf %11 : vector<8x8xf32> to vector<8x8xbf16>
    %cst_6 = arith.constant dense<0.000000e+00> : vector<8x8xf32>
    %13 = tpu.matmul %8, %10, %cst_6 {dimension_numbers = #tpu.dot_dimension_numbers<[1], [1], [0], [0], [0, 0, 1, 0], [], []>} : vector<8x8xbf16>, vector<8x8xbf16>, vector<8x8xf32> -> vector<8x8xf32>
    %cst_7 = arith.constant 0.353553385 : f32
    %14 = vector.broadcast %cst_7 : f32 to vector<8x8xf32>
    %15 = arith.mulf %13, %14 : vector<8x8xf32>
    %cst_8 = arith.constant dense<0xFF800000> : vector<8xf32>
    %16 = vector.multi_reduction <maximumf>, %15, %cst_8 [1] : vector<8x8xf32> to vector<8xf32>
    %17 = vector.shape_cast %16 : vector<8xf32> to vector<8x1xf32>
    %18 = vector.broadcast %17 : vector<8x1xf32> to vector<8x8xf32>
    %19 = arith.subf %15, %18 : vector<8x8xf32>
    %20 = math.exp %19 : vector<8x8xf32>
    %cst_9 = arith.constant dense<0.000000e+00> : vector<8xf32>
    %21 = vector.multi_reduction <add>, %20, %cst_9 [1] : vector<8x8xf32> to vector<8xf32>
    %22 = vector.shape_cast %21 : vector<8xf32> to vector<8x1xf32>
    %23 = tpu.reciprocal %22 {approx = true} : vector<8x1xf32> -> vector<8x1xf32>
    %24 = vector.broadcast %23 : vector<8x1xf32> to vector<8x8xf32>
    %25 = arith.mulf %20, %24 : vector<8x8xf32>
    %26 = arith.truncf %25 : vector<8x8xf32> to vector<8x8xbf16>
    %cst_10 = arith.constant dense<0.000000e+00> : vector<8x8xf32>
    %27 = tpu.matmul %26, %12, %cst_10 {dimension_numbers = #tpu.dot_dimension_numbers<[1], [0], [0], [1], [0, 0, 1, 1], [], []>} : vector<8x8xbf16>, vector<8x8xbf16>, vector<8x8xf32> -> vector<8x8xf32>
    %28 = arith.truncf %27 : vector<8x8xf32> to vector<8x8xbf16>
    %c0_11 = arith.constant 0 : index
    %c0_12 = arith.constant 0 : index
    %29 = vector.load %arg7[%c0_11, %c0_12] : memref<8x32xbf16, #tpu.memory_space<vmem>>, vector<8x8xbf16>
    tpu.vector_store %arg7[%c0_11, %c0_12], %28 {strides = array<i32>} : memref<8x32xbf16, #tpu.memory_space<vmem>>, vector<8x8xbf16>,
    %30 = vector.extract_strided_slice %6 {offsets = [0, 8], sizes = [8, 8], strides = [1, 1]} : vector<8x96xf32> to vector<8x8xf32>
    %31 = arith.truncf %30 : vector<8x8xf32> to vector<8x8xbf16>
    %32 = vector.extract_strided_slice %6 {offsets = [0, 40], sizes = [8, 8], strides = [1, 1]} : vector<8x96xf32> to vector<8x8xf32>
    %33 = arith.truncf %32 : vector<8x8xf32> to vector<8x8xbf16>
    %34 = vector.extract_strided_slice %6 {offsets = [0, 72], sizes = [8, 8], strides = [1, 1]} : vector<8x96xf32> to vector<8x8xf32>
    %35 = arith.truncf %34 : vector<8x8xf32> to vector<8x8xbf16>
    %cst_13 = arith.constant dense<0.000000e+00> : vector<8x8xf32>
    %36 = tpu.matmul %31, %33, %cst_13 {dimension_numbers = #tpu.dot_dimension_numbers<[1], [1], [0], [0], [0, 0, 1, 0], [], []>} : vector<8x8xbf16>, vector<8x8xbf16>, vector<8x8xf32> -> vector<8x8xf32>
    %cst_14 = arith.constant 0.353553385 : f32
    %37 = vector.broadcast %cst_14 : f32 to vector<8x8xf32>
    %38 = arith.mulf %36, %37 : vector<8x8xf32>
    %cst_15 = arith.constant dense<0xFF800000> : vector<8xf32>
    %39 = vector.multi_reduction <maximumf>, %38, %cst_15 [1] : vector<8x8xf32> to vector<8xf32>
    %40 = vector.shape_cast %39 : vector<8xf32> to vector<8x1xf32>
    %41 = vector.broadcast %40 : vector<8x1xf32> to vector<8x8xf32>
    %42 = arith.subf %38, %41 : vector<8x8xf32>
    %43 = math.exp %42 : vector<8x8xf32>
    %cst_16 = arith.constant dense<0.000000e+00> : vector<8xf32>
    %44 = vector.multi_reduction <add>, %43, %cst_16 [1] : vector<8x8xf32> to vector<8xf32>
    %45 = vector.shape_cast %44 : vector<8xf32> to vector<8x1xf32>
    %46 = tpu.reciprocal %45 {approx = true} : vector<8x1xf32> -> vector<8x1xf32>
    %47 = vector.broadcast %46 : vector<8x1xf32> to vector<8x8xf32>
    %48 = arith.mulf %43, %47 : vector<8x8xf32>
    %49 = arith.truncf %48 : vector<8x8xf32> to vector<8x8xbf16>
    %cst_17 = arith.constant dense<0.000000e+00> : vector<8x8xf32>
    %50 = tpu.matmul %49, %35, %cst_17 {dimension_numbers = #tpu.dot_dimension_numbers<[1], [0], [0], [1], [0, 0, 1, 1], [], []>} : vector<8x8xbf16>, vector<8x8xbf16>, vector<8x8xf32> -> vector<8x8xf32>
    %51 = arith.truncf %50 : vector<8x8xf32> to vector<8x8xbf16>
    %c0_18 = arith.constant 0 : index
    %c8 = arith.constant 8 : index
    %52 = vector.load %arg7[%c0_18, %c8] : memref<8x32xbf16, #tpu.memory_space<vmem>>, vector<8x8xbf16>
    tpu.vector_store %arg7[%c0_18, %c8], %51 {strides = array<i32>} : memref<8x32xbf16, #tpu.memory_space<vmem>>, vector<8x8xbf16>,
    %53 = vector.extract_strided_slice %6 {offsets = [0, 16], sizes = [8, 8], strides = [1, 1]} : vector<8x96xf32> to vector<8x8xf32>
    %54 = arith.truncf %53 : vector<8x8xf32> to vector<8x8xbf16>
    %55 = vector.extract_strided_slice %6 {offsets = [0, 48], sizes = [8, 8], strides = [1, 1]} : vector<8x96xf32> to vector<8x8xf32>
    %56 = arith.truncf %55 : vector<8x8xf32> to vector<8x8xbf16>
    %57 = vector.extract_strided_slice %6 {offsets = [0, 80], sizes = [8, 8], strides = [1, 1]} : vector<8x96xf32> to vector<8x8xf32>
    %58 = arith.truncf %57 : vector<8x8xf32> to vector<8x8xbf16>
    %cst_19 = arith.constant dense<0.000000e+00> : vector<8x8xf32>
    %59 = tpu.matmul %54, %56, %cst_19 {dimension_numbers = #tpu.dot_dimension_numbers<[1], [1], [0], [0], [0, 0, 1, 0], [], []>} : vector<8x8xbf16>, vector<8x8xbf16>, vector<8x8xf32> -> vector<8x8xf32>
    %cst_20 = arith.constant 0.353553385 : f32
    %60 = vector.broadcast %cst_20 : f32 to vector<8x8xf32>
    %61 = arith.mulf %59, %60 : vector<8x8xf32>
    %cst_21 = arith.constant dense<0xFF800000> : vector<8xf32>
    %62 = vector.multi_reduction <maximumf>, %61, %cst_21 [1] : vector<8x8xf32> to vector<8xf32>
    %63 = vector.shape_cast %62 : vector<8xf32> to vector<8x1xf32>
    %64 = vector.broadcast %63 : vector<8x1xf32> to vector<8x8xf32>
    %65 = arith.subf %61, %64 : vector<8x8xf32>
    %66 = math.exp %65 : vector<8x8xf32>
    %cst_22 = arith.constant dense<0.000000e+00> : vector<8xf32>
    %67 = vector.multi_reduction <add>, %66, %cst_22 [1] : vector<8x8xf32> to vector<8xf32>
    %68 = vector.shape_cast %67 : vector<8xf32> to vector<8x1xf32>
    %69 = tpu.reciprocal %68 {approx = true} : vector<8x1xf32> -> vector<8x1xf32>
    %70 = vector.broadcast %69 : vector<8x1xf32> to vector<8x8xf32>
    %71 = arith.mulf %66, %70 : vector<8x8xf32>
    %72 = arith.truncf %71 : vector<8x8xf32> to vector<8x8xbf16>
    %cst_23 = arith.constant dense<0.000000e+00> : vector<8x8xf32>
    %73 = tpu.matmul %72, %58, %cst_23 {dimension_numbers = #tpu.dot_dimension_numbers<[1], [0], [0], [1], [0, 0, 1, 1], [], []>} : vector<8x8xbf16>, vector<8x8xbf16>, vector<8x8xf32> -> vector<8x8xf32>
    %74 = arith.truncf %73 : vector<8x8xf32> to vector<8x8xbf16>
    %c0_24 = arith.constant 0 : index
    %c16 = arith.constant 16 : index
    %75 = vector.load %arg7[%c0_24, %c16] : memref<8x32xbf16, #tpu.memory_space<vmem>>, vector<8x8xbf16>
    tpu.vector_store %arg7[%c0_24, %c16], %74 {strides = array<i32>} : memref<8x32xbf16, #tpu.memory_space<vmem>>, vector<8x8xbf16>,
    %76 = vector.extract_strided_slice %6 {offsets = [0, 24], sizes = [8, 8], strides = [1, 1]} : vector<8x96xf32> to vector<8x8xf32>
    %77 = arith.truncf %76 : vector<8x8xf32> to vector<8x8xbf16>
    %78 = vector.extract_strided_slice %6 {offsets = [0, 56], sizes = [8, 8], strides = [1, 1]} : vector<8x96xf32> to vector<8x8xf32>
    %79 = arith.truncf %78 : vector<8x8xf32> to vector<8x8xbf16>
    %80 = vector.extract_strided_slice %6 {offsets = [0, 88], sizes = [8, 8], strides = [1, 1]} : vector<8x96xf32> to vector<8x8xf32>
    %81 = arith.truncf %80 : vector<8x8xf32> to vector<8x8xbf16>
    %cst_25 = arith.constant dense<0.000000e+00> : vector<8x8xf32>
    %82 = tpu.matmul %77, %79, %cst_25 {dimension_numbers = #tpu.dot_dimension_numbers<[1], [1], [0], [0], [0, 0, 1, 0], [], []>} : vector<8x8xbf16>, vector<8x8xbf16>, vector<8x8xf32> -> vector<8x8xf32>
    %cst_26 = arith.constant 0.353553385 : f32
    %83 = vector.broadcast %cst_26 : f32 to vector<8x8xf32>
    %84 = arith.mulf %82, %83 : vector<8x8xf32>
    %cst_27 = arith.constant dense<0xFF800000> : vector<8xf32>
    %85 = vector.multi_reduction <maximumf>, %84, %cst_27 [1] : vector<8x8xf32> to vector<8xf32>
    %86 = vector.shape_cast %85 : vector<8xf32> to vector<8x1xf32>
    %87 = vector.broadcast %86 : vector<8x1xf32> to vector<8x8xf32>
    %88 = arith.subf %84, %87 : vector<8x8xf32>
    %89 = math.exp %88 : vector<8x8xf32>
    %cst_28 = arith.constant dense<0.000000e+00> : vector<8xf32>
    %90 = vector.multi_reduction <add>, %89, %cst_28 [1] : vector<8x8xf32> to vector<8xf32>
    %91 = vector.shape_cast %90 : vector<8xf32> to vector<8x1xf32>
    %92 = tpu.reciprocal %91 {approx = true} : vector<8x1xf32> -> vector<8x1xf32>
    %93 = vector.broadcast %92 : vector<8x1xf32> to vector<8x8xf32>
    %94 = arith.mulf %89, %93 : vector<8x8xf32>
    %95 = arith.truncf %94 : vector<8x8xf32> to vector<8x8xbf16>
    %cst_29 = arith.constant dense<0.000000e+00> : vector<8x8xf32>
    %96 = tpu.matmul %95, %81, %cst_29 {dimension_numbers = #tpu.dot_dimension_numbers<[1], [0], [0], [1], [0, 0, 1, 1], [], []>} : vector<8x8xbf16>, vector<8x8xbf16>, vector<8x8xf32> -> vector<8x8xf32>
    %97 = arith.truncf %96 : vector<8x8xf32> to vector<8x8xbf16>
    %c0_30 = arith.constant 0 : index
    %c24 = arith.constant 24 : index
    %98 = vector.load %arg7[%c0_30, %c24] : memref<8x32xbf16, #tpu.memory_space<vmem>>, vector<8x8xbf16>
    tpu.vector_store %arg7[%c0_30, %c24], %97 {strides = array<i32>} : memref<8x32xbf16, #tpu.memory_space<vmem>>, vector<8x8xbf16>,
    %c0_31 = arith.constant 0 : index
    %c0_32 = arith.constant 0 : index
    %99 = vector.load %arg7[%c0_31, %c0_32] : memref<8x32xbf16, #tpu.memory_space<vmem>>, vector<8x32xbf16>
    %c0_33 = arith.constant 0 : index
    %c0_34 = arith.constant 0 : index
    %100 = vector.load %arg4[%c0_33, %c0_34] : memref<32x32xbf16, #tpu.memory_space<vmem>>, vector<32x32xbf16>
    %cst_35 = arith.constant dense<0.000000e+00> : vector<8x32xf32>
    %101 = tpu.matmul %99, %100, %cst_35 {dimension_numbers = #tpu.dot_dimension_numbers<[1], [0], [0], [1], [0, 0, 1, 1], [], []>} : vector<8x32xbf16>, vector<32x32xbf16>, vector<8x32xf32> -> vector<8x32xf32>
    %c0_36 = arith.constant 0 : index
    %c0_37 = arith.constant 0 : index
    %102 = vector.load %arg5[%c0_36, %c0_37] : memref<1x32xf32, #tpu.memory_space<vmem>>, vector<1x32xf32>
    %103 = vector.broadcast %102 : vector<1x32xf32> to vector<8x32xf32>
    %104 = arith.addf %101, %103 : vector<8x32xf32>
    %c0_38 = arith.constant 0 : index
    %c0_39 = arith.constant 0 : index
    %c0_40 = arith.constant 0 : index
    %105 = vector.load %arg6[%c0_38, %c0_39, %c0_40] : memref<1x8x32xf32, #tpu.memory_space<vmem>>, vector<1x8x32xf32>
    %106 = vector.shape_cast %105 : vector<1x8x32xf32> to vector<8x32xf32>
    %107 = vector.shape_cast %104 : vector<8x32xf32> to vector<1x8x32xf32>
    tpu.vector_store %arg6[%c0_38, %c0_39, %c0_40], %107 {strides = array<i32>} : memref<1x8x32xf32, #tpu.memory_space<vmem>>, vector<1x8x32xf32>,
    return
  }
  func.func @transform_0(%arg0: i32) -> (i32, i32, i32) {
    %c0_i32 = arith.constant 0 : i32
    %c0_i32_0 = arith.constant 0 : i32
    %c0_i32_1 = arith.constant 0 : i32
    return %arg0, %c0_i32, %c0_i32_0 : i32, i32, i32
  }
  func.func @transform_1(%arg0: i32) -> (i32, i32) {
    %c0_i32 = arith.constant 0 : i32
    %c0_i32_0 = arith.constant 0 : i32
    %c0_i32_1 = arith.constant 0 : i32
    return %c0_i32, %c0_i32_0 : i32, i32
  }
  func.func @transform_2(%arg0: i32) -> (i32, i32) {
    %c0_i32 = arith.constant 0 : i32
    %c0_i32_0 = arith.constant 0 : i32
    %c0_i32_1 = arith.constant 0 : i32
    return %c0_i32, %c0_i32_0 : i32, i32
  }
  func.func @transform_3(%arg0: i32) -> (i32, i32) {
    %c0_i32 = arith.constant 0 : i32
    %c0_i32_0 = arith.constant 0 : i32
    %c0_i32_1 = arith.constant 0 : i32
    return %c0_i32, %c0_i32_0 : i32, i32
  }
  func.func @transform_4(%arg0: i32) -> (i32, i32) {
    %c0_i32 = arith.constant 0 : i32
    %c0_i32_0 = arith.constant 0 : i32
    %c0_i32_1 = arith.constant 0 : i32
    return %c0_i32, %c0_i32_0 : i32, i32
  }
  func.func @transform_5(%arg0: i32) -> (i32, i32, i32) {
    %c0_i32 = arith.constant 0 : i32
    %c0_i32_0 = arith.constant 0 : i32
    %c0_i32_1 = arith.constant 0 : i32
    return %arg0, %c0_i32, %c0_i32_0 : i32, i32, i32
  }
}

</mosaic_0001>

<llo_original>
// kernel: tpu_custom_call.1
$region0: #{tpu_custom_call.1}
  #allocation0 [shape = 'u32[]', space=smem, size = 0x4, offset = 0x4, fixed_abs, tag = 'smem constant byte address 0x4 - core index']
  #allocation1 [shape = 'u32[144,128]{1,0:T(1,128)}', space=vmem, size = 0x12000, scoped, tag = 'internal scratch']
  #allocation2 [shape = 'bf16[8,32]{1,0:T(8,128)(2,1)}', space=vmem, size = 0x800, scoped, tag = 'scratch operand']
  %s0 = inlined_call_operand.hbm [shape: bf16[2,8,32], index: 0, kind: input, shape index: {}]
  %s1 = inlined_call_operand.hbm [shape: bf16[32,96], index: 1, kind: input, shape index: {}]
  %s2 = inlined_call_operand.vmem [shape: f32[1,96], index: 2, kind: input, shape index: {}]
  %s3 = inlined_call_operand.hbm [shape: bf16[32,32], index: 3, kind: input, shape index: {}]
  %s4 = inlined_call_operand.vmem [shape: f32[1,32], index: 4, kind: input, shape index: {}]
  %s5 = inlined_call_operand.hbm [shape: f32[2,8,32], index: 5, kind: output, shape index: {}]
  %s6 = sld [smem:[#allocation0]]
  $region65: #{tpu_custom_call.1} parent=0
    _
  %s8 = ssub.s32 1, %s6
  %s9 = scalar_select 0, %s8, %s6
  $region1: #{tpu_custom_call.1} parent=0
    #allocation3 [shape = 'u8[4096]{0}', space=vmem, size = 0x1000, scoped, tag = 'input window, operand 0']
    #allocation4 [shape = 's32[2]{0}', space=sflag, size = 0x8, scoped, tag = 'scoped memory for tpu_custom_call.1']
    #allocation5 [shape = 's32[2]{0}', space=sflag, size = 0x8, scoped, tag = 'scoped memory for tpu_custom_call.1']
    #allocation6 [shape = 'u8[8192]{0}', space=vmem, size = 0x2000, scoped, tag = 'input window, operand 1, single buffered']
    #allocation7 [shape = 's32[1]{0}', space=sflag, size = 0x4, scoped, tag = 'scoped memory for tpu_custom_call.1']
    #allocation8 [shape = 'u8[8192]{0}', space=vmem, size = 0x2000, scoped, tag = 'input window, operand 3, single buffered']
    #allocation9 [shape = 'u8[8192]{0}', space=vmem, size = 0x2000, scoped, tag = 'output window, operand 0']
    %10 = vsyncpa [#allocation4], 0
    %s11 = scalar_lea.sflag [#allocation4], 1
    %12 = vsyncpa %s11, 0
    %13 = vsyncpa [#allocation7], 0
    %14 = vsyncpa [#allocation5], 0
    %s15 = scalar_lea.sflag [#allocation5], 1
    %16 = vsyncpa %s15, 0
    loop: start=0, step=1, limit=4
    $region2: #{tpu_custom_call.1} parent=1 // loop_pre_header
      _
    $region3: #{tpu_custom_call.1} parent=1 // loop_header
      %s18 = sphi 0, %s22
      %p19 = scmp.ge.s32.totalorder %s18, 4
      %s28 = sphi 0, %s30
      %s31 = sphi 0, %s28
      %s32 = sphi 0, %s31
      %s48 = sphi 0, %s32
      %s52 = sphi 0, %s52
      %s54 = sphi 0, %s52
      %s55 = sphi 0, %s54
      %s69 = sphi 0, %s55
      %s73 = sphi 0, %s73
      %s75 = sphi 0, %s73
      %s76 = sphi 0, %s75
      %s90 = sphi 0, %s76
      %s94 = sphi 0, %s94
      %s96 = sphi 0, %s94
      %s97 = sphi 0, %s96
      %s111 = sphi 0, %s97
      %s115 = sphi 0, %s115
      %s117 = sphi 0, %s115
      %s118 = sphi 0, %s117
      %s132 = sphi 0, %s118
      %s138 = sphi 0, %s140
      %s141 = sphi 0, %s138
      %s142 = sphi 0, %s141
      %s158 = sphi 0, %s142
    $region4: #{tpu_custom_call.1} parent=1 // loop_header_branch
      %21 = sbr.rel (%p19) target = $region8
    $region5: #{tpu_custom_call.1} parent=1 // loop_body
      %s23 = ssub.s32 %s18, 1
      %s24 = ssub.s32 %s18, 2
      %s25 = sadd.s32 %s18, 1
      %s26 = ssub.s32 %s18, %s25
      %p27 = scmp.eq.s32.totalorder %s26, 0
      %s29 = sadd.s32 %s28, 1
      %s30 = scalar_select %p27, %s28, %s29
      %p33 = pneg %p27
      %p34 = scmp.eq.s32.totalorder %s18, 1
      %p35 = por %p33, %p34
      %p36 = scmp.ne.s32.totalorder %s28, %s31
      %p37 = scmp.eq.s32.totalorder %s18, 0
      %p38 = por %p36, %p37
      %p39 = scmp.ne.s32.totalorder %s28, %s31
      %p40 = scmp.eq.s32.totalorder %s23, 1
      %p41 = por %p39, %p40
      %p42 = scmp.ne.s32.totalorder %s31, %s32
      %p43 = scmp.eq.s32.totalorder %s23, 0
      %p44 = por %p42, %p43
      %p45 = scmp.ne.s32.totalorder %s31, %s32
      %p46 = scmp.eq.s32.totalorder %s24, 1
      %p47 = por %p45, %p46
      %p49 = scmp.ne.s32.totalorder %s32, %s48
      %p50 = scmp.eq.s32.totalorder %s24, 0
      %p51 = por %p49, %p50
      %s53 = sadd.s32 %s52, 1
      %p56 = scmp.eq.s32.totalorder %s18, 1
      %p57 = scmp.ne.s32.totalorder %s52, %s54
      %p58 = scmp.eq.s32.totalorder %s18, 0
      %p59 = por %p57, %p58
      %p60 = scmp.ne.s32.totalorder %s52, %s54
      %p61 = scmp.eq.s32.totalorder %s23, 1
      %p62 = por %p60, %p61
      %p63 = scmp.ne.s32.totalorder %s54, %s55
      %p64 = scmp.eq.s32.totalorder %s23, 0
      %p65 = por %p63, %p64
      %p66 = scmp.ne.s32.totalorder %s54, %s55
      %p67 = scmp.eq.s32.totalorder %s24, 1
      %p68 = por %p66, %p67
      %p70 = scmp.ne.s32.totalorder %s55, %s69
      %p71 = scmp.eq.s32.totalorder %s24, 0
      %p72 = por %p70, %p71
      %s74 = sadd.s32 %s73, 1
      %p77 = scmp.eq.s32.totalorder %s18, 1
      %p78 = scmp.ne.s32.totalorder %s73, %s75
      %p79 = scmp.eq.s32.totalorder %s18, 0
      %p80 = por %p78, %p79
      %p81 = scmp.ne.s32.totalorder %s73, %s75
      %p82 = scmp.eq.s32.totalorder %s23, 1
      %p83 = por %p81, %p82
      %p84 = scmp.ne.s32.totalorder %s75, %s76
      %p85 = scmp.eq.s32.totalorder %s23, 0
      %p86 = por %p84, %p85
      %p87 = scmp.ne.s32.totalorder %s75, %s76
      %p88 = scmp.eq.s32.totalorder %s24, 1
      %p89 = por %p87, %p88
      %p91 = scmp.ne.s32.totalorder %s76, %s90
      %p92 = scmp.eq.s32.totalorder %s24, 0
      %p93 = por %p91, %p92
      %s95 = sadd.s32 %s94, 1
      %p98 = scmp.eq.s32.totalorder %s18, 1
      %p99 = scmp.ne.s32.totalorder %s94, %s96
      %p100 = scmp.eq.s32.totalorder %s18, 0
      %p101 = por %p99, %p100
      %p102 = scmp.ne.s32.totalorder %s94, %s96
      %p103 = scmp.eq.s32.totalorder %s23, 1
      %p104 = por %p102, %p103
      %p105 = scmp.ne.s32.totalorder %s96, %s97
      %p106 = scmp.eq.s32.totalorder %s23, 0
      %p107 = por %p105, %p106
      %p108 = scmp.ne.s32.totalorder %s96, %s97
      %p109 = scmp.eq.s32.totalorder %s24, 1
      %p110 = por %p108, %p109
      %p112 = scmp.ne.s32.totalorder %s97, %s111
      %p113 = scmp.eq.s32.totalorder %s24, 0
      %p114 = por %p112, %p113
      %s116 = sadd.s32 %s115, 1
      %p119 = scmp.eq.s32.totalorder %s18, 1
      %p120 = scmp.ne.s32.totalorder %s115, %s117
      %p121 = scmp.eq.s32.totalorder %s18, 0
      %p122 = por %p120, %p121
      %p123 = scmp.ne.s32.totalorder %s115, %s117
      %p124 = scmp.eq.s32.totalorder %s23, 1
      %p125 = por %p123, %p124
      %p126 = scmp.ne.s32.totalorder %s117, %s118
      %p127 = scmp.eq.s32.totalorder %s23, 0
      %p128 = por %p126, %p127
      %p129 = scmp.ne.s32.totalorder %s117, %s118
      %p130 = scmp.eq.s32.totalorder %s24, 1
      %p131 = por %p129, %p130
      %p133 = scmp.ne.s32.totalorder %s118, %s132
      %p134 = scmp.eq.s32.totalorder %s24, 0
      %p135 = por %p133, %p134
      %s136 = ssub.s32 %s18, %s25
      %p137 = scmp.eq.s32.totalorder %s136, 0
      %s139 = sadd.s32 %s138, 1
      %s140 = scalar_select %p137, %s138, %s139
      %p143 = pneg %p137
      %p144 = scmp.eq.s32.totalorder %s18, 1
      %p145 = por %p143, %p144
      %p146 = scmp.ne.s32.totalorder %s138, %s141
      %p147 = scmp.eq.s32.totalorder %s18, 0
      %p148 = por %p146, %p147
      %p149 = scmp.ne.s32.totalorder %s138, %s141
      %p150 = scmp.eq.s32.totalorder %s23, 1
      %p151 = por %p149, %p150
      %p152 = scmp.ne.s32.totalorder %s141, %s142
      %p153 = scmp.eq.s32.totalorder %s23, 0
      %p154 = por %p152, %p153
      %p155 = scmp.ne.s32.totalorder %s141, %s142
      %p156 = scmp.eq.s32.totalorder %s24, 1
      %p157 = por %p155, %p156
      %p159 = scmp.ne.s32.totalorder %s142, %s158
      %p160 = scmp.eq.s32.totalorder %s24, 0
      %p161 = por %p159, %p160
      %p162 = scmp.le.s32.totalorder 1, %s18
      %p163 = scmp.lt.s32.totalorder %s18, 3
      %p164 = pnand %p162, %p163
      %p165 = pneg %p164
      // Predicated region
      $region9: #{tpu_custom_call.1} parent=5 // pred_check
        _
      $region10: #{tpu_custom_call.1} parent=5 // pred_check_branch
        %167 = sbr.rel (%p164) target = $region12
      $region11: #{tpu_custom_call.1} parent=5 // pred_region
        %s168 = ssub.s32 %s18, 1
        // Predicated region
        $region13: #{tpu_custom_call.1} parent=11 // pred_check
          %p169 = pneg %p65
        $region14: #{tpu_custom_call.1} parent=11 // pred_check_branch
          %171 = sbr.rel (%p169) target = $region16
        $region15: #{tpu_custom_call.1} parent=11 // pred_region
          %s173 = ssub.s32 256, 256
          %174 = vsyncadd [#allocation7], %s173
          %s175 = sshll.u32 [#allocation6], 4
          %s176 = int_to_ptr.vmem [resolvable:$true] %s175
          %181 = dma.hbm_to_vmem [thread:$0]  %s1, 256, %s176, [#allocation7], 64, 64, 4
        $region16: #{tpu_custom_call.1} parent=11 // pred_fallthru
          _
        // Predicated region
        $region17: #{tpu_custom_call.1} parent=11 // pred_check
          %p182 = pneg %p86
        $region18: #{tpu_custom_call.1} parent=11 // pred_check_branch
          %184 = sbr.rel (%p182) target = $region20
        $region19: #{tpu_custom_call.1} parent=11 // pred_region
          _
        $region20: #{tpu_custom_call.1} parent=11 // pred_fallthru
          _
        // Predicated region
        $region21: #{tpu_custom_call.1} parent=11 // pred_check
          %p185 = pneg %p107
        $region22: #{tpu_custom_call.1} parent=11 // pred_check_branch
          %187 = sbr.rel (%p185) target = $region24
        $region23: #{tpu_custom_call.1} parent=11 // pred_region
          %s189 = ssub.s32 256, 256
          %190 = vsyncadd [#allocation7], %s189
          %s191 = sshll.u32 [#allocation8], 4
          %s192 = int_to_ptr.vmem [resolvable:$true] %s191
          %197 = dma.hbm_to_vmem [thread:$0]  %s3, 256, %s192, [#allocation7], 64, 64, 4
        $region24: #{tpu_custom_call.1} parent=11 // pred_fallthru
          _
        // Predicated region
        $region25: #{tpu_custom_call.1} parent=11 // pred_check
          %p198 = pneg %p128
        $region26: #{tpu_custom_call.1} parent=11 // pred_check_branch
          %200 = sbr.rel (%p198) target = $region28
        $region27: #{tpu_custom_call.1} parent=11 // pred_region
          _
        $region28: #{tpu_custom_call.1} parent=11 // pred_fallthru
          _
      $region12: #{tpu_custom_call.1} parent=5 // pred_fallthru
        _
      %p201 = scmp.lt.s32.totalorder %s18, 2
      // Predicated region
      $region29: #{tpu_custom_call.1} parent=5 // pred_check
        %p202 = pneg %p201
      $region30: #{tpu_custom_call.1} parent=5 // pred_check_branch
        %204 = sbr.rel (%p202) target = $region32
      $region31: #{tpu_custom_call.1} parent=5 // pred_region
        // Predicated region
        $region33: #{tpu_custom_call.1} parent=31 // pred_check
          %p205 = pneg %p38
        $region34: #{tpu_custom_call.1} parent=31 // pred_check_branch
          %207 = sbr.rel (%p205) target = $region36
        $region35: #{tpu_custom_call.1} parent=31 // pred_region
          %s208 = sand.u32 %s28, 1
          %s209 = scalar_lea.sflag [#allocation4], %s208
          %s210 = sand.u32 %s28, 1
          %s211 = smul.addr %s210, 4
          %s212 = scalar_lea.vmem [#allocation3], %s211
          %s214 = ssub.s32 64, 64
          %215 = vsyncadd %s209, %s214
          %s216 = smul.addr %s18, 64
          %s217 = scalar_lea.hbm %s0, %s216
          %s219 = sshll.u32 %s212, 4
          %s220 = int_to_ptr.vmem [resolvable:$true] %s219
          %222 = dma.hbm_to_vmem [thread:$0]  %s217, 64, %s220, %s209
        $region36: #{tpu_custom_call.1} parent=31 // pred_fallthru
          _
      $region32: #{tpu_custom_call.1} parent=5 // pred_fallthru
        _
      %p223 = scmp.le.s32.totalorder 1, %s18
      %p224 = scmp.lt.s32.totalorder %s18, 3
      %p225 = pnand %p223, %p224
      %p226 = pneg %p225
      // Predicated region
      $region37: #{tpu_custom_call.1} parent=5 // pred_check
        _
      $region38: #{tpu_custom_call.1} parent=5 // pred_check_branch
        %228 = sbr.rel (%p225) target = $region40
      $region39: #{tpu_custom_call.1} parent=5 // pred_region
        %s229 = ssub.s32 %s18, 1
        %s230 = sand.u32 %s31, 1
        %s231 = scalar_lea.sflag [#allocation4], %s230
        %s232 = sand.u32 %s31, 1
        %s233 = smul.addr %s232, 4
        %s234 = scalar_lea.vmem [#allocation3], %s233
        // Predicated region
        $region41: #{tpu_custom_call.1} parent=39 // pred_check
          %p235 = pneg %p44
        $region42: #{tpu_custom_call.1} parent=39 // pred_check_branch
          %237 = sbr.rel (%p235) target = $region44
        $region43: #{tpu_custom_call.1} parent=39 // pred_region
          %238 = dma.done %s231, 64
        $region44: #{tpu_custom_call.1} parent=39 // pred_fallthru
          _
        // Predicated region
        $region45: #{tpu_custom_call.1} parent=39 // pred_check
          %p239 = pneg %p65
        $region46: #{tpu_custom_call.1} parent=39 // pred_check_branch
          %241 = sbr.rel (%p239) target = $region48
        $region47: #{tpu_custom_call.1} parent=39 // pred_region
          %242 = dma.done [#allocation7], 256
        $region48: #{tpu_custom_call.1} parent=39 // pred_fallthru
          _
        // Predicated region
        $region49: #{tpu_custom_call.1} parent=39 // pred_check
          %p243 = pneg %p107
        $region50: #{tpu_custom_call.1} parent=39 // pred_check_branch
          %245 = sbr.rel (%p243) target = $region52
        $region51: #{tpu_custom_call.1} parent=39 // pred_region
          %246 = dma.done [#allocation7], 256
        $region52: #{tpu_custom_call.1} parent=39 // pred_fallthru
          _
        %s247 = sand.u32 %s31, 1
        %s248 = scalar_lea.sflag [#allocation4], %s247
        %s249 = sand.u32 %s31, 1
        %s250 = smul.addr %s249, 4
        %s251 = scalar_lea.vmem [#allocation3], %s250
        %p252 = pneg %p44
        %p253 = pneg %p41
        %p254 = pneg %p65
        %p255 = pneg %p62
        %p256 = pneg %p86
        %p257 = pneg %p83
        %p258 = pneg %p107
        %p259 = pneg %p104
        %p260 = pneg %p128
        %p261 = pneg %p125
        %p262 = pneg %p154
        %p263 = pneg %p151
        %s264 = sand.u32 %s141, 1
        %s265 = scalar_lea.sflag [#allocation5], %s264
        %s266 = sand.u32 %s141, 1
        %s267 = smul.addr %s266, 8
        %s268 = scalar_lea.vmem [#allocation9], %s267
        %v270 = vld [vmem:[%s234] sm:$0xf]
        %v271 = vld [vmem:[#allocation6] sm:$0xf]
        %v272 = vld [vmem:[#allocation6 + $0x4] sm:$0xf]
        %v273 = vld [vmem:[#allocation6 + $0x8] sm:$0xf]
        %v274 = vld [vmem:[#allocation6 + $0xc] sm:$0xf]
        %v275 = vld [vmem:[%s2] sm:$0x1]
        %v277 = vlaneseq
        %v278 = vshrl.u32 %v277, 7
        %v279 = vsub.s32 0, %v278
        %v280 = vrot.slane %v275, %v279
        %v286 = vunpack.c.l.b16 %v271
        %v287 = vunpack.c.l.b16 %v272
        %v288 = vunpack.c.l.b16 %v273
        %v289 = vunpack.c.l.b16 %v274
        %v290 = vpack.c.b16 %v287, %v286
        %v291 = vpack.c.b16 %v289, %v288
        %vm294 = vcmask 261120
        %v296 = vsel %vm294, %v270, 0
        %298 = vmatprep.subr.bf16.mxu0 0
        %299 = vmatpush1.bf16.msra.mxu0 %v290
        %300 = vmatprep.subr.bf16.mxu0 0
        %301 = vmatpush1.bf16.msra.mxu0 %v291
        %302 = vmatprep.subr.bf16.mxu0 0
        %303 = vmatpush1.bf16.msra.mxu0 0
        %304 = vmatprep.subr.bf16.mxu0 0
        %305 = vmatpush1.bf16.msra.mxu0 0
        %306 = vmatprep.subr.bf16.mxu0 0
        %307 = vmatpush1.bf16.msra.mxu0 0
        %308 = vmatprep.subr.bf16.mxu0 0
        %309 = vmatpush1.bf16.msra.mxu0 0
        %310 = vmatprep.subr.bf16.mxu0 0
        %311 = vmatpush1.bf16.msra.mxu0 0
        %312 = vmatprep.subr.bf16.mxu0 0
        %313 = vmatpush1.bf16.msra.mxu0 0
        %314 = vmatprep.subr.bf16.mxu0 0
        %315 = vmatpush1.bf16.msra.mxu0 0
        %316 = vmatprep.subr.bf16.mxu0 0
        %317 = vmatpush1.bf16.msra.mxu0 0
        %318 = vmatprep.subr.bf16.mxu0 0
        %319 = vmatpush1.bf16.msra.mxu0 0
        %320 = vmatprep.subr.bf16.mxu0 0
        %321 = vmatpush1.bf16.msra.mxu0 0
        %322 = vmatprep.subr.bf16.mxu0 0
        %323 = vmatpush1.bf16.msra.mxu0 0
        %324 = vmatprep.subr.bf16.mxu0 0
        %325 = vmatpush1.bf16.msra.mxu0 0
        %326 = vmatprep.subr.bf16.mxu0 0
        %327 = vmatpush1.bf16.msra.mxu0 0
        %328 = vmatprep.subr.bf16.mxu0 0
        %329 = vmatpush1.bf16.msra.mxu0 0
        %330 = vmatprep.mubr.bf16.mxu0 0
        %331 = vmatmul.mubr.bf16.gmra.mrb[0].mxu0 %v296
        %v332 = vpop.f32.mrb[0].mxu0
        %v333 = vadd.f32 %v280, %v332
        %v334 = vpop.f32.mrb[0].mxu0
        %v335 = vpop.f32.mrb[0].mxu0
        %v336 = vpop.f32.mrb[0].mxu0
        %337 = vdwg.mxu0
        %v338 = vpack.c.bf16 %v333, %v333
        %340 = vrot.lane.b32.xlu0 %v338, 96
        %v341 = vpop.permute.xlu0 %340
        %vm342 = vcmask 64512
        %v344 = vsel %vm342, %v338, 0
        %v347 = vsel %vm342, %v341, 0
        %349 = vmatprep.subr.bf16.mxu0 0
        %350 = vmatpush1.bf16.xpose.msra.mxu0 %v347
        %351 = vmatprep.subr.bf16.mxu0 0
        %352 = vmatpush1.bf16.xpose.msra.mxu0 0
        %353 = vmatprep.subr.bf16.mxu0 0
        %354 = vmatpush1.bf16.xpose.msra.mxu0 0
        %355 = vmatprep.subr.bf16.mxu0 0
        %356 = vmatpush1.bf16.xpose.msra.mxu0 0
        %357 = vmatprep.subr.bf16.mxu0 0
        %358 = vmatpush1.bf16.xpose.msra.mxu0 0
        %359 = vmatprep.subr.bf16.mxu0 0
        %360 = vmatpush1.bf16.xpose.msra.mxu0 0
        %361 = vmatprep.subr.bf16.mxu0 0
        %362 = vmatpush1.bf16.xpose.msra.mxu0 0
        %363 = vmatprep.subr.bf16.mxu0 0
        %364 = vmatpush1.bf16.xpose.msra.mxu0 0
        %365 = vmatprep.subr.bf16.mxu0 0
        %366 = vmatpush1.bf16.xpose.msra.mxu0 0
        %367 = vmatprep.subr.bf16.mxu0 0
        %368 = vmatpush1.bf16.xpose.msra.mxu0 0
        %369 = vmatprep.subr.bf16.mxu0 0
        %370 = vmatpush1.bf16.xpose.msra.mxu0 0
        %371 = vmatprep.subr.bf16.mxu0 0
        %372 = vmatpush1.bf16.xpose.msra.mxu0 0
        %373 = vmatprep.subr.bf16.mxu0 0
        %374 = vmatpush1.bf16.xpose.msra.mxu0 0
        %375 = vmatprep.subr.bf16.mxu0 0
        %376 = vmatpush1.bf16.xpose.msra.mxu0 0
        %377 = vmatprep.subr.bf16.mxu0 0
        %378 = vmatpush1.bf16.xpose.msra.mxu0 0
        %379 = vmatprep.subr.bf16.mxu0 0
        %380 = vmatpush1.bf16.xpose.msra.mxu0 0
        %381 = vmatprep.mubr.bf16.mxu0 0
        %382 = vmatmul.mubr.bf16.gmra.mrb[0].mxu0 %v344
        %v383 = vpop.f32.mrb[0].mxu0
        %v384 = vadd.f32 0.0, %v383
        %v385 = vpop.f32.mrb[0].mxu0
        %v386 = vpop.f32.mrb[0].mxu0
        %v387 = vpop.f32.mrb[0].mxu0
        %388 = vdwg.mxu0
        %v389 = vmul.f32 %v384, 0.35355338
        %v390 = vsel %vm342, %v389, -inf
        %391 = vmax.xlane.f32.xlu0 %v390
        %v392 = vpop.xlane.xlu0 %391
        %v393 = vsub.f32 %v389, %v392
        %v394 = vmul.f32 %v393, 1.442695
        %v395 = vpow.pop %v394
        %v396 = vsel %vm342, %v395, 0.0
        %397 = vadd.xlane.f32.xlu0 %v396
        %v398 = vpop.xlane.xlu0 %397
        %v399 = vrcp.pop %v398
        %v400 = vmul.f32 %v395, %v399
        %v401 = vpack.c.bf16 %v400, %v400
        %402 = vrot.lane.b32.xlu0 %v338, 64
        %v403 = vpop.permute.xlu0 %402
        %v405 = vsel %vm342, %v401, 0
        %vm407 = vcmask 1043456
        %v409 = vsel %vm407, %v403, 0
        %411 = vmatprep.subr.bf16.mxu0 0
        %412 = vmatpush1.bf16.msra.mxu0 %v409
        %413 = vmatprep.subr.bf16.mxu0 0
        %414 = vmatpush1.bf16.msra.mxu0 0
        %415 = vmatprep.subr.bf16.mxu0 0
        %416 = vmatpush1.bf16.msra.mxu0 0
        %417 = vmatprep.subr.bf16.mxu0 0
        %418 = vmatpush1.bf16.msra.mxu0 0
        %419 = vmatprep.subr.bf16.mxu0 0
        %420 = vmatpush1.bf16.msra.mxu0 0
        %421 = vmatprep.subr.bf16.mxu0 0
        %422 = vmatpush1.bf16.msra.mxu0 0
        %423 = vmatprep.subr.bf16.mxu0 0
        %424 = vmatpush1.bf16.msra.mxu0 0
        %425 = vmatprep.subr.bf16.mxu0 0
        %426 = vmatpush1.bf16.msra.mxu0 0
        %427 = vmatprep.subr.bf16.mxu0 0
        %428 = vmatpush1.bf16.msra.mxu0 0
        %429 = vmatprep.subr.bf16.mxu0 0
        %430 = vmatpush1.bf16.msra.mxu0 0
        %431 = vmatprep.subr.bf16.mxu0 0
        %432 = vmatpush1.bf16.msra.mxu0 0
        %433 = vmatprep.subr.bf16.mxu0 0
        %434 = vmatpush1.bf16.msra.mxu0 0
        %435 = vmatprep.subr.bf16.mxu0 0
        %436 = vmatpush1.bf16.msra.mxu0 0
        %437 = vmatprep.subr.bf16.mxu0 0
        %438 = vmatpush1.bf16.msra.mxu0 0
        %439 = vmatprep.subr.bf16.mxu0 0
        %440 = vmatpush1.bf16.msra.mxu0 0
        %441 = vmatprep.subr.bf16.mxu0 0
        %442 = vmatpush1.bf16.msra.mxu0 0
        %443 = vmatprep.mubr.bf16.mxu0 0
        %444 = vmatmul.mubr.bf16.gmra.mrb[0].mxu0 %v405
        %v445 = vpop.f32.mrb[0].mxu0
        %v446 = vadd.f32 0.0, %v445
        %v447 = vpop.f32.mrb[0].mxu0
        %v448 = vpop.f32.mrb[0].mxu0
        %v449 = vpop.f32.mrb[0].mxu0
        %450 = vdwg.mxu0
        %v451 = vpack.c.bf16 %v446, %v446
        %vm452 = vcmask 60416
        %453 = vst.msk [vmem:[#allocation2] sm:$0xf] %vm452, %v451
        %454 = vrot.lane.b32.xlu0 %v338, 120
        %v455 = vpop.permute.xlu0 %454
        %456 = vrot.lane.b32.xlu0 %v338, 88
        %v457 = vpop.permute.xlu0 %456
        %v459 = vsel %vm342, %v455, 0
        %v462 = vsel %vm342, %v457, 0
        %464 = vmatprep.subr.bf16.mxu0 0
        %465 = vmatpush1.bf16.xpose.msra.mxu0 %v462
        %466 = vmatprep.subr.bf16.mxu0 0
        %467 = vmatpush1.bf16.xpose.msra.mxu0 0
        %468 = vmatprep.subr.bf16.mxu0 0
        %469 = vmatpush1.bf16.xpose.msra.mxu0 0
        %470 = vmatprep.subr.bf16.mxu0 0
        %471 = vmatpush1.bf16.xpose.msra.mxu0 0
        %472 = vmatprep.subr.bf16.mxu0 0
        %473 = vmatpush1.bf16.xpose.msra.mxu0 0
        %474 = vmatprep.subr.bf16.mxu0 0
        %475 = vmatpush1.bf16.xpose.msra.mxu0 0
        %476 = vmatprep.subr.bf16.mxu0 0
        %477 = vmatpush1.bf16.xpose.msra.mxu0 0
        %478 = vmatprep.subr.bf16.mxu0 0
        %479 = vmatpush1.bf16.xpose.msra.mxu0 0
        %480 = vmatprep.subr.bf16.mxu0 0
        %481 = vmatpush1.bf16.xpose.msra.mxu0 0
        %482 = vmatprep.subr.bf16.mxu0 0
        %483 = vmatpush1.bf16.xpose.msra.mxu0 0
        %484 = vmatprep.subr.bf16.mxu0 0
        %485 = vmatpush1.bf16.xpose.msra.mxu0 0
        %486 = vmatprep.subr.bf16.mxu0 0
        %487 = vmatpush1.bf16.xpose.msra.mxu0 0
        %488 = vmatprep.subr.bf16.mxu0 0
        %489 = vmatpush1.bf16.xpose.msra.mxu0 0
        %490 = vmatprep.subr.bf16.mxu0 0
        %491 = vmatpush1.bf16.xpose.msra.mxu0 0
        %492 = vmatprep.subr.bf16.mxu0 0
        %493 = vmatpush1.bf16.xpose.msra.mxu0 0
        %494 = vmatprep.subr.bf16.mxu0 0
        %495 = vmatpush1.bf16.xpose.msra.mxu0 0
        %496 = vmatprep.mubr.bf16.mxu0 0
        %497 = vmatmul.mubr.bf16.gmra.mrb[0].mxu0 %v459
        %v498 = vpop.f32.mrb[0].mxu0
        %v499 = vadd.f32 0.0, %v498
        %v500 = vpop.f32.mrb[0].mxu0
        %v501 = vpop.f32.mrb[0].mxu0
        %v502 = vpop.f32.mrb[0].mxu0
        %503 = vdwg.mxu0
        %v504 = vmul.f32 %v499, 0.35355338
        %v505 = vsel %vm342, %v504, -inf
        %506 = vmax.xlane.f32.xlu0 %v505
        %v507 = vpop.xlane.xlu0 %506
        %v508 = vsub.f32 %v504, %v507
        %v509 = vmul.f32 %v508, 1.442695
        %v510 = vpow.pop %v509
        %v511 = vsel %vm342, %v510, 0.0
        %512 = vadd.xlane.f32.xlu0 %v511
        %v513 = vpop.xlane.xlu0 %512
        %v514 = vrcp.pop %v513
        %v515 = vmul.f32 %v510, %v514
        %v516 = vpack.c.bf16 %v515, %v515
        %517 = vrot.lane.b32.xlu0 %v338, 56
        %v518 = vpop.permute.xlu0 %517
        %v520 = vsel %vm342, %v516, 0
        %v523 = vsel %vm407, %v518, 0
        %525 = vmatprep.subr.bf16.mxu0 0
        %526 = vmatpush1.bf16.msra.mxu0 %v523
        %527 = vmatprep.subr.bf16.mxu0 0
        %528 = vmatpush1.bf16.msra.mxu0 0
        %529 = vmatprep.subr.bf16.mxu0 0
        %530 = vmatpush1.bf16.msra.mxu0 0
        %531 = vmatprep.subr.bf16.mxu0 0
        %532 = vmatpush1.bf16.msra.mxu0 0
        %533 = vmatprep.subr.bf16.mxu0 0
        %534 = vmatpush1.bf16.msra.mxu0 0
        %535 = vmatprep.subr.bf16.mxu0 0
        %536 = vmatpush1.bf16.msra.mxu0 0
        %537 = vmatprep.subr.bf16.mxu0 0
        %538 = vmatpush1.bf16.msra.mxu0 0
        %539 = vmatprep.subr.bf16.mxu0 0
        %540 = vmatpush1.bf16.msra.mxu0 0
        %541 = vmatprep.subr.bf16.mxu0 0
        %542 = vmatpush1.bf16.msra.mxu0 0
        %543 = vmatprep.subr.bf16.mxu0 0
        %544 = vmatpush1.bf16.msra.mxu0 0
        %545 = vmatprep.subr.bf16.mxu0 0
        %546 = vmatpush1.bf16.msra.mxu0 0
        %547 = vmatprep.subr.bf16.mxu0 0
        %548 = vmatpush1.bf16.msra.mxu0 0
        %549 = vmatprep.subr.bf16.mxu0 0
        %550 = vmatpush1.bf16.msra.mxu0 0
        %551 = vmatprep.subr.bf16.mxu0 0
        %552 = vmatpush1.bf16.msra.mxu0 0
        %553 = vmatprep.subr.bf16.mxu0 0
        %554 = vmatpush1.bf16.msra.mxu0 0
        %555 = vmatprep.subr.bf16.mxu0 0
        %556 = vmatpush1.bf16.msra.mxu0 0
        %557 = vmatprep.mubr.bf16.mxu0 0
        %558 = vmatmul.mubr.bf16.gmra.mrb[0].mxu0 %v520
        %v559 = vpop.f32.mrb[0].mxu0
        %v560 = vadd.f32 0.0, %v559
        %v561 = vpop.f32.mrb[0].mxu0
        %v562 = vpop.f32.mrb[0].mxu0
        %v563 = vpop.f32.mrb[0].mxu0
        %564 = vdwg.mxu0
        %v565 = vpack.c.bf16 %v560, %v560
        %v567 = vunpack.c.l.b16 %v565
        %v568 = vpack.c.b16 %v567, %v567
        %569 = vrot.lane.b32.xlu0 %v568, 8
        %v570 = vpop.permute.xlu0 %569
        %vm572 = vcmask 126016
        %573 = vst.msk [vmem:[#allocation2] sm:$0xf] %vm572, %v570
        %574 = vrot.lane.b32.xlu0 %v338, 112
        %v575 = vpop.permute.xlu0 %574
        %576 = vrot.lane.b32.xlu0 %v338, 80
        %v577 = vpop.permute.xlu0 %576
        %v579 = vsel %vm342, %v575, 0
        %v582 = vsel %vm342, %v577, 0
        %584 = vmatprep.subr.bf16.mxu0 0
        %585 = vmatpush1.bf16.xpose.msra.mxu0 %v582
        %586 = vmatprep.subr.bf16.mxu0 0
        %587 = vmatpush1.bf16.xpose.msra.mxu0 0
        %588 = vmatprep.subr.bf16.mxu0 0
        %589 = vmatpush1.bf16.xpose.msra.mxu0 0
        %590 = vmatprep.subr.bf16.mxu0 0
        %591 = vmatpush1.bf16.xpose.msra.mxu0 0
        %592 = vmatprep.subr.bf16.mxu0 0
        %593 = vmatpush1.bf16.xpose.msra.mxu0 0
        %594 = vmatprep.subr.bf16.mxu0 0
        %595 = vmatpush1.bf16.xpose.msra.mxu0 0
        %596 = vmatprep.subr.bf16.mxu0 0
        %597 = vmatpush1.bf16.xpose.msra.mxu0 0
        %598 = vmatprep.subr.bf16.mxu0 0
        %599 = vmatpush1.bf16.xpose.msra.mxu0 0
        %600 = vmatprep.subr.bf16.mxu0 0
        %601 = vmatpush1.bf16.xpose.msra.mxu0 0
        %602 = vmatprep.subr.bf16.mxu0 0
        %603 = vmatpush1.bf16.xpose.msra.mxu0 0
        %604 = vmatprep.subr.bf16.mxu0 0
        %605 = vmatpush1.bf16.xpose.msra.mxu0 0
        %606 = vmatprep.subr.bf16.mxu0 0
        %607 = vmatpush1.bf16.xpose.msra.mxu0 0
        %608 = vmatprep.subr.bf16.mxu0 0
        %609 = vmatpush1.bf16.xpose.msra.mxu0 0
        %610 = vmatprep.subr.bf16.mxu0 0
        %611 = vmatpush1.bf16.xpose.msra.mxu0 0
        %612 = vmatprep.subr.bf16.mxu0 0
        %613 = vmatpush1.bf16.xpose.msra.mxu0 0
        %614 = vmatprep.subr.bf16.mxu0 0
        %615 = vmatpush1.bf16.xpose.msra.mxu0 0
        %616 = vmatprep.mubr.bf16.mxu0 0
        %617 = vmatmul.mubr.bf16.gmra.mrb[0].mxu0 %v579
        %v618 = vpop.f32.mrb[0].mxu0
        %v619 = vadd.f32 0.0, %v618
        %v620 = vpop.f32.mrb[0].mxu0
        %v621 = vpop.f32.mrb[0].mxu0
        %v622 = vpop.f32.mrb[0].mxu0
        %623 = vdwg.mxu0
        %v624 = vmul.f32 %v619, 0.35355338
        %v625 = vsel %vm342, %v624, -inf
        %626 = vmax.xlane.f32.xlu0 %v625
        %v627 = vpop.xlane.xlu0 %626
        %v628 = vsub.f32 %v624, %v627
        %v629 = vmul.f32 %v628, 1.442695
        %v630 = vpow.pop %v629
        %v631 = vsel %vm342, %v630, 0.0
        %632 = vadd.xlane.f32.xlu0 %v631
        %v633 = vpop.xlane.xlu0 %632
        %v634 = vrcp.pop %v633
        %v635 = vmul.f32 %v630, %v634
        %v636 = vpack.c.bf16 %v635, %v635
        %637 = vrot.lane.b32.xlu0 %v338, 48
        %v638 = vpop.permute.xlu0 %637
        %v640 = vsel %vm342, %v636, 0
        %v643 = vsel %vm407, %v638, 0
        %645 = vmatprep.subr.bf16.mxu0 0
        %646 = vmatpush1.bf16.msra.mxu0 %v643
        %647 = vmatprep.subr.bf16.mxu0 0
        %648 = vmatpush1.bf16.msra.mxu0 0
        %649 = vmatprep.subr.bf16.mxu0 0
        %650 = vmatpush1.bf16.msra.mxu0 0
        %651 = vmatprep.subr.bf16.mxu0 0
        %652 = vmatpush1.bf16.msra.mxu0 0
        %653 = vmatprep.subr.bf16.mxu0 0
        %654 = vmatpush1.bf16.msra.mxu0 0
        %655 = vmatprep.subr.bf16.mxu0 0
        %656 = vmatpush1.bf16.msra.mxu0 0
        %657 = vmatprep.subr.bf16.mxu0 0
        %658 = vmatpush1.bf16.msra.mxu0 0
        %659 = vmatprep.subr.bf16.mxu0 0
        %660 = vmatpush1.bf16.msra.mxu0 0
        %661 = vmatprep.subr.bf16.mxu0 0
        %662 = vmatpush1.bf16.msra.mxu0 0
        %663 = vmatprep.subr.bf16.mxu0 0
        %664 = vmatpush1.bf16.msra.mxu0 0
        %665 = vmatprep.subr.bf16.mxu0 0
        %666 = vmatpush1.bf16.msra.mxu0 0
        %667 = vmatprep.subr.bf16.mxu0 0
        %668 = vmatpush1.bf16.msra.mxu0 0
        %669 = vmatprep.subr.bf16.mxu0 0
        %670 = vmatpush1.bf16.msra.mxu0 0
        %671 = vmatprep.subr.bf16.mxu0 0
        %672 = vmatpush1.bf16.msra.mxu0 0
        %673 = vmatprep.subr.bf16.mxu0 0
        %674 = vmatpush1.bf16.msra.mxu0 0
        %675 = vmatprep.subr.bf16.mxu0 0
        %676 = vmatpush1.bf16.msra.mxu0 0
        %677 = vmatprep.mubr.bf16.mxu0 0
        %678 = vmatmul.mubr.bf16.gmra.mrb[0].mxu0 %v640
        %v679 = vpop.f32.mrb[0].mxu0
        %v680 = vadd.f32 0.0, %v679
        %v681 = vpop.f32.mrb[0].mxu0
        %v682 = vpop.f32.mrb[0].mxu0
        %v683 = vpop.f32.mrb[0].mxu0
        %684 = vdwg.mxu0
        %v685 = vpack.c.bf16 %v680, %v680
        %v687 = vunpack.c.l.b16 %v685
        %v688 = vpack.c.b16 %v687, %v687
        %689 = vrot.lane.b32.xlu0 %v688, 16
        %v690 = vpop.permute.xlu0 %689
        %vm692 = vcmask 191616
        %693 = vst.msk [vmem:[#allocation2] sm:$0xf] %vm692, %v690
        %694 = vrot.lane.b32.xlu0 %v338, 104
        %v695 = vpop.permute.xlu0 %694
        %696 = vrot.lane.b32.xlu0 %v338, 72
        %v697 = vpop.permute.xlu0 %696
        %v699 = vsel %vm342, %v695, 0
        %v702 = vsel %vm342, %v697, 0
        %704 = vmatprep.subr.bf16.mxu0 0
        %705 = vmatpush1.bf16.xpose.msra.mxu0 %v702
        %706 = vmatprep.subr.bf16.mxu0 0
        %707 = vmatpush1.bf16.xpose.msra.mxu0 0
        %708 = vmatprep.subr.bf16.mxu0 0
        %709 = vmatpush1.bf16.xpose.msra.mxu0 0
        %710 = vmatprep.subr.bf16.mxu0 0
        %711 = vmatpush1.bf16.xpose.msra.mxu0 0
        %712 = vmatprep.subr.bf16.mxu0 0
        %713 = vmatpush1.bf16.xpose.msra.mxu0 0
        %714 = vmatprep.subr.bf16.mxu0 0
        %715 = vmatpush1.bf16.xpose.msra.mxu0 0
        %716 = vmatprep.subr.bf16.mxu0 0
        %717 = vmatpush1.bf16.xpose.msra.mxu0 0
        %718 = vmatprep.subr.bf16.mxu0 0
        %719 = vmatpush1.bf16.xpose.msra.mxu0 0
        %720 = vmatprep.subr.bf16.mxu0 0
        %721 = vmatpush1.bf16.xpose.msra.mxu0 0
        %722 = vmatprep.subr.bf16.mxu0 0
        %723 = vmatpush1.bf16.xpose.msra.mxu0 0
        %724 = vmatprep.subr.bf16.mxu0 0
        %725 = vmatpush1.bf16.xpose.msra.mxu0 0
        %726 = vmatprep.subr.bf16.mxu0 0
        %727 = vmatpush1.bf16.xpose.msra.mxu0 0
        %728 = vmatprep.subr.bf16.mxu0 0
        %729 = vmatpush1.bf16.xpose.msra.mxu0 0
        %730 = vmatprep.subr.bf16.mxu0 0
        %731 = vmatpush1.bf16.xpose.msra.mxu0 0
        %732 = vmatprep.subr.bf16.mxu0 0
        %733 = vmatpush1.bf16.xpose.msra.mxu0 0
        %734 = vmatprep.subr.bf16.mxu0 0
        %735 = vmatpush1.bf16.xpose.msra.mxu0 0
        %736 = vmatprep.mubr.bf16.mxu0 0
        %737 = vmatmul.mubr.bf16.gmra.mrb[0].mxu0 %v699
        %v738 = vpop.f32.mrb[0].mxu0
        %v739 = vadd.f32 0.0, %v738
        %v740 = vpop.f32.mrb[0].mxu0
        %v741 = vpop.f32.mrb[0].mxu0
        %v742 = vpop.f32.mrb[0].mxu0
        %743 = vdwg.mxu0
        %v744 = vmul.f32 %v739, 0.35355338
        %v745 = vsel %vm342, %v744, -inf
        %746 = vmax.xlane.f32.xlu0 %v745
        %v747 = vpop.xlane.xlu0 %746
        %v748 = vsub.f32 %v744, %v747
        %v749 = vmul.f32 %v748, 1.442695
        %v750 = vpow.pop %v749
        %v751 = vsel %vm342, %v750, 0.0
        %752 = vadd.xlane.f32.xlu0 %v751
        %v753 = vpop.xlane.xlu0 %752
        %v754 = vrcp.pop %v753
        %v755 = vmul.f32 %v750, %v754
        %v756 = vpack.c.bf16 %v755, %v755
        %757 = vrot.lane.b32.xlu0 %v338, 40
        %v758 = vpop.permute.xlu0 %757
        %v760 = vsel %vm342, %v756, 0
        %v763 = vsel %vm407, %v758, 0
        %765 = vmatprep.subr.bf16.mxu0 0
        %766 = vmatpush1.bf16.msra.mxu0 %v763
        %767 = vmatprep.subr.bf16.mxu0 0
        %768 = vmatpush1.bf16.msra.mxu0 0
        %769 = vmatprep.subr.bf16.mxu0 0
        %770 = vmatpush1.bf16.msra.mxu0 0
        %771 = vmatprep.subr.bf16.mxu0 0
        %772 = vmatpush1.bf16.msra.mxu0 0
        %773 = vmatprep.subr.bf16.mxu0 0
        %774 = vmatpush1.bf16.msra.mxu0 0
        %775 = vmatprep.subr.bf16.mxu0 0
        %776 = vmatpush1.bf16.msra.mxu0 0
        %777 = vmatprep.subr.bf16.mxu0 0
        %778 = vmatpush1.bf16.msra.mxu0 0
        %779 = vmatprep.subr.bf16.mxu0 0
        %780 = vmatpush1.bf16.msra.mxu0 0
        %781 = vmatprep.subr.bf16.mxu0 0
        %782 = vmatpush1.bf16.msra.mxu0 0
        %783 = vmatprep.subr.bf16.mxu0 0
        %784 = vmatpush1.bf16.msra.mxu0 0
        %785 = vmatprep.subr.bf16.mxu0 0
        %786 = vmatpush1.bf16.msra.mxu0 0
        %787 = vmatprep.subr.bf16.mxu0 0
        %788 = vmatpush1.bf16.msra.mxu0 0
        %789 = vmatprep.subr.bf16.mxu0 0
        %790 = vmatpush1.bf16.msra.mxu0 0
        %791 = vmatprep.subr.bf16.mxu0 0
        %792 = vmatpush1.bf16.msra.mxu0 0
        %793 = vmatprep.subr.bf16.mxu0 0
        %794 = vmatpush1.bf16.msra.mxu0 0
        %795 = vmatprep.subr.bf16.mxu0 0
        %796 = vmatpush1.bf16.msra.mxu0 0
        %797 = vmatprep.mubr.bf16.mxu0 0
        %798 = vmatmul.mubr.bf16.gmra.mrb[0].mxu0 %v760
        %v799 = vpop.f32.mrb[0].mxu0
        %v800 = vadd.f32 0.0, %v799
        %v801 = vpop.f32.mrb[0].mxu0
        %v802 = vpop.f32.mrb[0].mxu0
        %v803 = vpop.f32.mrb[0].mxu0
        %804 = vdwg.mxu0
        %v805 = vpack.c.bf16 %v800, %v800
        %v807 = vunpack.c.l.b16 %v805
        %v808 = vpack.c.b16 %v807, %v807
        %809 = vrot.lane.b32.xlu0 %v808, 24
        %v810 = vpop.permute.xlu0 %809
        %vm812 = vcmask 257216
        %813 = vst.msk [vmem:[#allocation2] sm:$0xf] %vm812, %v810
        %v814 = vld [vmem:[#allocation2] sm:$0xf]
        %v815 = vld [vmem:[#allocation8] sm:$0xf]
        %v816 = vld [vmem:[#allocation8 + $0x4] sm:$0xf]
        %v817 = vld [vmem:[#allocation8 + $0x8] sm:$0xf]
        %v818 = vld [vmem:[#allocation8 + $0xc] sm:$0xf]
        %v819 = vld [vmem:[%s4] sm:$0x1]
        %v821 = vlaneseq
        %v822 = vshrl.u32 %v821, 7
        %v823 = vsub.s32 0, %v822
        %v824 = vrot.slane %v819, %v823
        %v830 = vunpack.c.l.b16 %v815
        %v831 = vunpack.c.l.b16 %v816
        %v832 = vunpack.c.l.b16 %v817
        %v833 = vunpack.c.l.b16 %v818
        %v834 = vpack.c.b16 %v831, %v830
        %v835 = vpack.c.b16 %v833, %v832
        %v839 = vsel %vm294, %v814, 0
        %841 = vmatprep.subr.bf16.mxu0 0
        %842 = vmatpush1.bf16.msra.mxu0 %v834
        %843 = vmatprep.subr.bf16.mxu0 0
        %844 = vmatpush1.bf16.msra.mxu0 %v835
        %845 = vmatprep.subr.bf16.mxu0 0
        %846 = vmatpush1.bf16.msra.mxu0 0
        %847 = vmatprep.subr.bf16.mxu0 0
        %848 = vmatpush1.bf16.msra.mxu0 0
        %849 = vmatprep.subr.bf16.mxu0 0
        %850 = vmatpush1.bf16.msra.mxu0 0
        %851 = vmatprep.subr.bf16.mxu0 0
        %852 = vmatpush1.bf16.msra.mxu0 0
        %853 = vmatprep.subr.bf16.mxu0 0
        %854 = vmatpush1.bf16.msra.mxu0 0
        %855 = vmatprep.subr.bf16.mxu0 0
        %856 = vmatpush1.bf16.msra.mxu0 0
        %857 = vmatprep.subr.bf16.mxu0 0
        %858 = vmatpush1.bf16.msra.mxu0 0
        %859 = vmatprep.subr.bf16.mxu0 0
        %860 = vmatpush1.bf16.msra.mxu0 0
        %861 = vmatprep.subr.bf16.mxu0 0
        %862 = vmatpush1.bf16.msra.mxu0 0
        %863 = vmatprep.subr.bf16.mxu0 0
        %864 = vmatpush1.bf16.msra.mxu0 0
        %865 = vmatprep.subr.bf16.mxu0 0
        %866 = vmatpush1.bf16.msra.mxu0 0
        %867 = vmatprep.subr.bf16.mxu0 0
        %868 = vmatpush1.bf16.msra.mxu0 0
        %869 = vmatprep.subr.bf16.mxu0 0
        %870 = vmatpush1.bf16.msra.mxu0 0
        %871 = vmatprep.subr.bf16.mxu0 0
        %872 = vmatpush1.bf16.msra.mxu0 0
        %873 = vmatprep.mubr.bf16.mxu0 0
        %874 = vmatmul.mubr.bf16.gmra.mrb[0].mxu0 %v839
        %v875 = vpop.f32.mrb[0].mxu0
        %v876 = vadd.f32 %v824, %v875
        %v877 = vpop.f32.mrb[0].mxu0
        %v878 = vpop.f32.mrb[0].mxu0
        %v879 = vpop.f32.mrb[0].mxu0
        %880 = vdwg.mxu0
        %881 = vst.msk [vmem:[%s268] sm:$0xff] %vm294, %v876
        %s882 = sand.u32 %s141, 1
        %s883 = scalar_lea.sflag [#allocation5], %s882
        %s884 = sand.u32 %s141, 1
        %s885 = smul.addr %s884, 8
        %s886 = scalar_lea.vmem [#allocation9], %s885
        // Predicated region
        $region53: #{tpu_custom_call.1} parent=39 // pred_check
          %p887 = pneg %p151
        $region54: #{tpu_custom_call.1} parent=39 // pred_check_branch
          %889 = sbr.rel (%p887) target = $region56
        $region55: #{tpu_custom_call.1} parent=39 // pred_region
          %s891 = ssub.s32 128, 128
          %892 = vsyncadd %s883, %s891
          %s893 = smul.addr %s23, 128
          %s894 = scalar_lea.hbm %s5, %s893
          %s896 = sshll.u32 %s886, 4
          %s897 = int_to_ptr.vmem [resolvable:$true] %s896
          %899 = dma.vmem_to_hbm [thread:$0]  %s897, 128, %s894, %s883
        $region56: #{tpu_custom_call.1} parent=39 // pred_fallthru
          _
      $region40: #{tpu_custom_call.1} parent=5 // pred_fallthru
        _
      %p900 = scmp.le.s32.totalorder 2, %s18
      // Predicated region
      $region57: #{tpu_custom_call.1} parent=5 // pred_check
        %p901 = pneg %p900
      $region58: #{tpu_custom_call.1} parent=5 // pred_check_branch
        %903 = sbr.rel (%p901) target = $region60
      $region59: #{tpu_custom_call.1} parent=5 // pred_region
        %s904 = ssub.s32 %s18, 2
        // Predicated region
        $region61: #{tpu_custom_call.1} parent=59 // pred_check
          %p905 = pneg %p157
        $region62: #{tpu_custom_call.1} parent=59 // pred_check_branch
          %907 = sbr.rel (%p905) target = $region64
        $region63: #{tpu_custom_call.1} parent=59 // pred_region
          %s908 = sand.u32 %s142, 1
          %s909 = scalar_lea.sflag [#allocation5], %s908
          %s910 = sand.u32 %s142, 1
          %s911 = smul.addr %s910, 8
          %s912 = scalar_lea.vmem [#allocation9], %s911
          %913 = dma.done %s909, 128
        $region64: #{tpu_custom_call.1} parent=59 // pred_fallthru
          _
      $region60: #{tpu_custom_call.1} parent=5 // pred_fallthru
        _
    $region6: #{tpu_custom_call.1} parent=1 // loop_footer
      %s22 = sadd.s32 1, %s18
    $region7: #{tpu_custom_call.1} parent=1 // loop_footer_branch
      %17 = sbr.rel target = $region3
    $region8: #{tpu_custom_call.1} parent=1 // loop_exit
      _
    %914 = vsyncpa [#allocation4], 1
    %s915 = scalar_lea.sflag [#allocation4], 1
    %916 = vsyncpa %s915, 1
    %917 = vsyncpa [#allocation7], 1
    %918 = vsyncpa [#allocation5], 1
    %s919 = scalar_lea.sflag [#allocation5], 1
    %920 = vsyncpa %s919, 1

</llo_original>
